<compile_context>
chip_gen: v6e
topology: v6e:2x2x1
jax: 0.10.0
libtpu: 0.0.40
codegen_flags: <defaults>
</compile_context>

<pallas_src>
import jax
import jax.numpy as jnp
from jax.experimental import pallas as pl
from jax.experimental.pallas import tpu as pltpu

LANES = 128


def rgcn_kernel(a_ref, h_ref, wf_ref, bf_ref, out_ref):
    # a_ref:  [Bt, R, N, N]      bf16 adjacency, A[b, r, dst, src] = edge multiplicity
    # h_ref:  [Bt, N, F]         node features (f32)
    # wf_ref: [(R+1)*F, 128]     fused weight  = [W_0;...;W_{R-1};W_loop] @ W_lin_pad / N
    # bf_ref: [1, 128]           fused bias    = bias @ W_lin_pad + b_lin_pad
    # out_ref:[1, Bt, 128]
    Bt, R, N, _ = a_ref.shape
    F = h_ref.shape[-1]

    # Column sums over destination nodes, accumulated in f32 directly from the bf16
    # data (no materialized f32 copy of A, no bf16 partial-sum range concern).
    colsum = jnp.sum(a_ref[...], axis=2, dtype=jnp.float32)          # [Bt, R, N]

    # Ones "relation" row: contracting it with h yields sum_n h -> the self-loop term.
    colsum_aug = jnp.concatenate(
        [colsum, jnp.ones((Bt, 1, N), jnp.float32)], axis=1)         # [Bt, R+1, N]

    # One batched MXU contraction replaces the per-relation VPU/XLU loop.
    v = jnp.einsum('brn,bnf->brf', colsum_aug, h_ref[...],
                   preferred_element_type=jnp.float32)               # [Bt, R+1, F]
    v_all = v.reshape(Bt, (R + 1) * F)                               # [Bt, (R+1)*F]

    # Single fused matmul: conv weights, 1/N pooling scale, conv bias and Linear
    # head were pre-folded into wf/bf in the wrapper.
    out = jnp.dot(v_all, wf_ref[...],
                  preferred_element_type=jnp.float32) + bf_ref[...]  # [Bt, 128]
    out_ref[0] = out.astype(out_ref.dtype)                           # lane-dense store


def _choose_graphs_per_step(B, R, N, F, requested=None):
    """Default: whole batch in one grid step (latency-bound regime on all generations).

    Shrink Bt only when the double-buffered adjacency + feature blocks would approach
    a conservative scoped-VMEM budget (guard for v7x: 64 MiB physical / 32 MiB default).
    """
    if requested is not None:
        return max(1, min(requested, B))
    budget = 24 * 1024 * 1024

    def block_bytes(bt):
        adj = bt * R * N * N * 2            # bf16 adjacency block
        feat = bt * N * F * 4               # f32 feature block
        return 2 * (adj + feat)             # double-buffered pipeline allowance

    bt = B
    while bt > 1 and block_bytes(bt) > budget:
        bt = (bt + 1) // 2
    return bt


def rgcn_forward(adj, h, w_rel, w_loop, bias, w_lin, b_lin, *, graphs_per_step=None):
    B, R, N, _ = adj.shape
    F = h.shape[-1]
    O = w_rel.shape[-1]
    n_out = w_lin.shape[-1]

    Bt = _choose_graphs_per_step(B, R, N, F, graphs_per_step)
    B_pad = ((B + Bt - 1) // Bt) * Bt
    if B_pad != B:
        adj = jnp.pad(adj, ((0, B_pad - B), (0, 0), (0, 0), (0, 0)))
        h = jnp.pad(h, ((0, B_pad - B), (0, 0), (0, 0)))
    G = B_pad // Bt

    # bf16 storage for the adjacency (largest DMA input); integer edge counts <= 256 are exact.
    adj_bf16 = adj.astype(jnp.bfloat16)

    # Fold everything downstream of the aggregation into one weight/bias pair:
    #   out = (v_all @ W_all / N + bias) @ W_lin + b_lin
    #       =  v_all @ (W_all @ W_lin_pad / N)  +  (bias @ W_lin_pad + b_lin_pad)
    # The head is zero-padded to 128 lanes for a lane-dense output store.
    w_all = jnp.concatenate([w_rel.reshape(R * F, O), w_loop], axis=0)       # [(R+1)F, O]
    w_lin_pad = jnp.zeros((O, LANES), jnp.float32).at[:, :n_out].set(w_lin)
    b_lin_pad = jnp.zeros((LANES,), jnp.float32).at[:n_out].set(b_lin)
    w_fused = (w_all @ w_lin_pad) * (1.0 / N)                                # [(R+1)F, 128]
    b_fused = (bias @ w_lin_pad + b_lin_pad).reshape(1, LANES)               # [1, 128]

    out = pl.pallas_call(
        rgcn_kernel,
        out_shape=jax.ShapeDtypeStruct((G, Bt, LANES), jnp.float32),
        grid_spec=pltpu.PrefetchScalarGridSpec(
            num_scalar_prefetch=0,
            grid=(G,),
            in_specs=[
                pl.BlockSpec((Bt, R, N, N), lambda g: (g, 0, 0, 0)),
                pl.BlockSpec((Bt, N, F), lambda g: (g, 0, 0)),
                # Grid-invariant fused weight / bias (G is usually 1, so the extra
                # pipeline buffer they would otherwise need is moot).
                pl.BlockSpec(((R + 1) * F, LANES), lambda g: (0, 0)),
                pl.BlockSpec((1, LANES), lambda g: (0, 0)),
            ],
            out_specs=pl.BlockSpec((1, Bt, LANES), lambda g: (g, 0, 0)),
        ),
        compiler_params=pltpu.CompilerParams(
            # Independent graph groups; only relevant when G > 1 (large N/B) where it
            # lets the two v7x TensorCores split the grid.
            dimension_semantics=("parallel",),
        ),
    )(adj_bf16, h, w_fused, b_fused)

    return out.reshape(B_pad, LANES)[:B, :n_out]   # [B, 2]


def rgcn_reference(adj, h, w_rel, w_loop, bias, w_lin, b_lin):
    # Pure-JAX reference of the original (per-node) forward pass.
    msg = jnp.einsum('bnf,rfo->brno', h, w_rel)            # per-relation transformed feats
    agg = jnp.einsum('brds,brso->bdo', adj, msg)           # sum over incoming edges per rel
    hout = agg + jnp.einsum('bnf,fo->bno', h, w_loop) + bias
    pooled = hout.mean(axis=1)                             # AvgPooling over nodes
    return pooled @ w_lin + b_lin


if __name__ == "__main__":
    # Small shapes consistent with the module:
    B = 8          # batched graphs (Bt = B -> single grid step, full (8,128) output store)
    N = 16         # nodes per graph
    F = 8          # features_dim
    O = 32         # out_dim (num_layers=1 -> single RelGraphConv(features_dim, out_dim))
    R = 3          # num_rels
    E = 48         # edges per graph

    key = jax.random.PRNGKey(0)
    k_h, k_src, k_dst, k_rel, kw1, kw2, kw3, kw4, kw5 = jax.random.split(key, 9)

    # Node features
    h = jax.random.normal(k_h, (B, N, F), dtype=jnp.float32)

    # Random edge lists -> dense per-relation adjacency A[b, r, dst, src]
    src = jax.random.randint(k_src, (B, E), 0, N)
    dst = jax.random.randint(k_dst, (B, E), 0, N)
    etype = jax.random.randint(k_rel, (B, E), 0, R)   # g.edata['one_hot'] edge-type ids
    b_idx = jnp.repeat(jnp.arange(B)[:, None], E, axis=1)
    adj = jnp.zeros((B, R, N, N), dtype=jnp.float32).at[
        b_idx.ravel(), etype.ravel(), dst.ravel(), src.ravel()].add(1.0)

    # Deterministic parameter init (RelGraphConv weights, self-loop, bias, Linear head)
    w_rel = jax.random.normal(kw1, (R, F, O), dtype=jnp.float32) * 0.1
    w_loop = jax.random.normal(kw2, (F, O), dtype=jnp.float32) * 0.1
    bias = jax.random.normal(kw3, (O,), dtype=jnp.float32) * 0.1
    w_lin = jax.random.normal(kw4, (O, 2), dtype=jnp.float32) * 0.1
    b_lin = jax.random.normal(kw5, (2,), dtype=jnp.float32) * 0.1

    out = rgcn_forward(adj, h, w_rel, w_loop, bias, w_lin, b_lin)
    out = jax.block_until_ready(out)

    ref = rgcn_reference(adj, h, w_rel, w_loop, bias, w_lin, b_lin)
    assert out.shape == (B, 2)
    assert jnp.allclose(out, ref, atol=1e-4, rtol=1e-4), (out, ref)

    print("KERNEL_OK")
</pallas_src>

<mosaic_0001>
module attributes {stable_mosaic.version = 11 : i64} {
  func.func @rgcn_kernel(%arg0: i32, %arg1: memref<8x3x16x16xbf16, #tpu.memory_space<vmem>>, %arg2: memref<8x16x8xf32, #tpu.memory_space<vmem>>, %arg3: memref<32x128xf32, #tpu.memory_space<vmem>>, %arg4: memref<1x128xf32, #tpu.memory_space<vmem>>, %arg5: memref<1x8x128xf32, #tpu.memory_space<vmem>>) attributes {dimension_semantics = [#tpu.dimension_semantics<parallel>], iteration_bounds = array<i64: 1>, scalar_prefetch = 0 : i64, scratch_operands = 0 : i64, tpu.core_type = #tpu.core_type<tc>, window_params = [{transform_indices = @transform_0, window_bounds = array<i64: 8, 3, 16, 16>}, {transform_indices = @transform_1, window_bounds = array<i64: 8, 16, 8>}, {pipeline_mode = #tpu.pipeline_mode<synchronous>, transform_indices = @transform_2, window_bounds = array<i64: 32, 128>}, {pipeline_mode = #tpu.pipeline_mode<synchronous>, transform_indices = @transform_3, window_bounds = array<i64: 1, 128>}, {transform_indices = @transform_4, window_bounds = array<i64: 1, 8, 128>}]} {
    %c0 = arith.constant 0 : index
    %c0_0 = arith.constant 0 : index
    %c0_1 = arith.constant 0 : index
    %c0_2 = arith.constant 0 : index
    %0 = vector.load %arg1[%c0, %c0_0, %c0_1, %c0_2] : memref<8x3x16x16xbf16, #tpu.memory_space<vmem>>, vector<8x3x16x16xbf16>
    %1 = arith.extf %0 : vector<8x3x16x16xbf16> to vector<8x3x16x16xf32>
    %cst = arith.constant dense<0.000000e+00> : vector<8x3x16xf32>
    %2 = vector.multi_reduction <add>, %1, %cst [2] : vector<8x3x16x16xf32> to vector<8x3x16xf32>
    %cst_3 = arith.constant 1.000000e+00 : f32
    %3 = vector.broadcast %cst_3 : f32 to vector<8x1x16xf32>
    %4 = tpu.concatenate %2, %3 in 1 : vector<8x3x16xf32>, vector<8x1x16xf32> -> vector<8x4x16xf32>
    %c0_4 = arith.constant 0 : index
    %c0_5 = arith.constant 0 : index
    %c0_6 = arith.constant 0 : index
    %5 = vector.load %arg2[%c0_4, %c0_5, %c0_6] : memref<8x16x8xf32, #tpu.memory_space<vmem>>, vector<8x16x8xf32>
    "tpu.trace_start"() <{level = 10 : i32, message = "brn,bnf->brf"}> : () -> ()
    %cst_7 = arith.constant dense<0.000000e+00> : vector<8x4x8xf32>
    %6 = tpu.matmul %4, %5, %cst_7 {dimension_numbers = #tpu.dot_dimension_numbers<[2], [1], [1], [2], [0, 0, 0, 1, 1, 2], [0], [0]>} : vector<8x4x16xf32>, vector<8x16x8xf32>, vector<8x4x8xf32> -> vector<8x4x8xf32>
    "tpu.trace_stop"() : () -> ()
    %7 = vector.shape_cast %6 : vector<8x4x8xf32> to vector<8x32xf32>
    %c0_8 = arith.constant 0 : index
    %c0_9 = arith.constant 0 : index
    %8 = vector.load %arg3[%c0_8, %c0_9] : memref<32x128xf32, #tpu.memory_space<vmem>>, vector<32x128xf32>
    %cst_10 = arith.constant dense<0.000000e+00> : vector<8x128xf32>
    %9 = tpu.matmul %7, %8, %cst_10 {dimension_numbers = #tpu.dot_dimension_numbers<[1], [0], [0], [1], [0, 0, 1, 1], [], []>} : vector<8x32xf32>, vector<32x128xf32>, vector<8x128xf32> -> vector<8x128xf32>
    %c0_11 = arith.constant 0 : index
    %c0_12 = arith.constant 0 : index
    %10 = vector.load %arg4[%c0_11, %c0_12] : memref<1x128xf32, #tpu.memory_space<vmem>>, vector<1x128xf32>
    %11 = vector.broadcast %10 : vector<1x128xf32> to vector<8x128xf32>
    %12 = arith.addf %9, %11 : vector<8x128xf32>
    %c0_13 = arith.constant 0 : index
    %c0_14 = arith.constant 0 : index
    %c0_15 = arith.constant 0 : index
    %13 = vector.load %arg5[%c0_13, %c0_14, %c0_15] : memref<1x8x128xf32, #tpu.memory_space<vmem>>, vector<1x8x128xf32>
    %14 = vector.shape_cast %13 : vector<1x8x128xf32> to vector<8x128xf32>
    %15 = vector.shape_cast %12 : vector<8x128xf32> to vector<1x8x128xf32>
    tpu.vector_store %arg5[%c0_13, %c0_14, %c0_15], %15 {strides = array<i32>} : memref<1x8x128xf32, #tpu.memory_space<vmem>>, vector<1x8x128xf32>,
    return
  }
  func.func @transform_0(%arg0: i32) -> (i32, i32, i32, i32) {
    %c0_i32 = arith.constant 0 : i32
    %c0_i32_0 = arith.constant 0 : i32
    %c0_i32_1 = arith.constant 0 : i32
    %c0_i32_2 = arith.constant 0 : i32
    return %arg0, %c0_i32, %c0_i32_0, %c0_i32_1 : i32, i32, i32, i32
  }
  func.func @transform_1(%arg0: i32) -> (i32, i32, i32) {
    %c0_i32 = arith.constant 0 : i32
    %c0_i32_0 = arith.constant 0 : i32
    %c0_i32_1 = arith.constant 0 : i32
    return %arg0, %c0_i32, %c0_i32_0 : i32, i32, i32
  }
  func.func @transform_2(%arg0: i32) -> (i32, i32) {
    %c0_i32 = arith.constant 0 : i32
    %c0_i32_0 = arith.constant 0 : i32
    %c0_i32_1 = arith.constant 0 : i32
    return %c0_i32, %c0_i32_0 : i32, i32
  }
  func.func @transform_3(%arg0: i32) -> (i32, i32) {
    %c0_i32 = arith.constant 0 : i32
    %c0_i32_0 = arith.constant 0 : i32
    %c0_i32_1 = arith.constant 0 : i32
    return %c0_i32, %c0_i32_0 : i32, i32
  }
  func.func @transform_4(%arg0: i32) -> (i32, i32, i32) {
    %c0_i32 = arith.constant 0 : i32
    %c0_i32_0 = arith.constant 0 : i32
    %c0_i32_1 = arith.constant 0 : i32
    return %arg0, %c0_i32, %c0_i32_0 : i32, i32, i32
  }
}

</mosaic_0001>

<llo_original>
// kernel: tpu_custom_call.1
$region0: #{tpu_custom_call.1}
  #allocation0 [shape = 'u32[]', space=smem, size = 0x4, offset = 0x4, fixed_abs, tag = 'smem constant byte address 0x4 - core index']
  #allocation1 [shape = 'u32[144,128]{1,0:T(1,128)}', space=vmem, size = 0x12000, scoped, tag = 'internal scratch']
  %s0 = inlined_call_operand.vmem [shape: bf16[8,3,16,16], index: 0, kind: input, shape index: {}]
  %s1 = inlined_call_operand.vmem [shape: f32[8,16,8], index: 1, kind: input, shape index: {}]
  %s2 = inlined_call_operand.hbm [shape: f32[32,128], index: 2, kind: input, shape index: {}]
  %s3 = inlined_call_operand.vmem [shape: f32[1,128], index: 3, kind: input, shape index: {}]
  %s4 = inlined_call_operand.hbm [shape: f32[1,8,128], index: 4, kind: output, shape index: {}]
  %s5 = sld [smem:[#allocation0]]
  $region30: #{tpu_custom_call.1} parent=0
    _
  %s7 = ssub.s32 1, %s5
  %s8 = scalar_select 0, %s7, %s5
  $region1: #{tpu_custom_call.1} parent=0
    #allocation2 [shape = 'u8[16384]{0}', space=vmem, size = 0x4000, scoped, tag = 'input window, operand 2, single buffered']
    #allocation3 [shape = 's32[1]{0}', space=sflag, size = 0x4, scoped, tag = 'scoped memory for tpu_custom_call.1']
    #allocation4 [shape = 's32[1]{0}', space=sflag, size = 0x4, scoped, tag = 'scoped memory for tpu_custom_call.1']
    #allocation5 [shape = 'u8[4096]{0}', space=vmem, size = 0x1000, scoped, tag = 'output window, operand 0, single buffered']
    %9 = vsyncpa [#allocation3], 0
    %10 = vsyncpa [#allocation4], 0
    // Predicated region
    $region2: #{tpu_custom_call.1} parent=1 // pred_check
      _
    $region3: #{tpu_custom_call.1} parent=1 // pred_check_branch
      %12 = sbr.rel (0) target = $region5
    $region4: #{tpu_custom_call.1} parent=1 // pred_region
      _
    $region5: #{tpu_custom_call.1} parent=1 // pred_fallthru
      _
    // Predicated region
    $region6: #{tpu_custom_call.1} parent=1 // pred_check
      _
    $region7: #{tpu_custom_call.1} parent=1 // pred_check_branch
      %14 = sbr.rel (0) target = $region9
    $region8: #{tpu_custom_call.1} parent=1 // pred_region
      _
    $region9: #{tpu_custom_call.1} parent=1 // pred_fallthru
      _
    // Predicated region
    $region10: #{tpu_custom_call.1} parent=1 // pred_check
      _
    $region11: #{tpu_custom_call.1} parent=1 // pred_check_branch
      %16 = sbr.rel (0) target = $region13
    $region12: #{tpu_custom_call.1} parent=1 // pred_region
      %s18 = ssub.s32 512, 512
      %19 = vsyncadd [#allocation3], %s18
      %s20 = sshll.u32 [#allocation2], 4
      %s21 = int_to_ptr.vmem [resolvable:$true] %s20
      %26 = dma.hbm_to_vmem [thread:$0]  %s2, 512, %s21, [#allocation3], 128, 128, 8
    $region13: #{tpu_custom_call.1} parent=1 // pred_fallthru
      _
    // Predicated region
    $region14: #{tpu_custom_call.1} parent=1 // pred_check
      _
    $region15: #{tpu_custom_call.1} parent=1 // pred_check_branch
      %28 = sbr.rel (0) target = $region17
    $region16: #{tpu_custom_call.1} parent=1 // pred_region
      _
    $region17: #{tpu_custom_call.1} parent=1 // pred_fallthru
      _
    // Predicated region
    $region18: #{tpu_custom_call.1} parent=1 // pred_check
      _
    $region19: #{tpu_custom_call.1} parent=1 // pred_check_branch
      %30 = sbr.rel (0) target = $region21
    $region20: #{tpu_custom_call.1} parent=1 // pred_region
      %31 = dma.done [#allocation3], 512
    $region21: #{tpu_custom_call.1} parent=1 // pred_fallthru
      _
    %v32 = vld [vmem:[%s0] sm:$0xf]
    %v33 = vld [vmem:[%s0 + $0x4] sm:$0xf]
    %v34 = vld [vmem:[%s0 + $0x8] sm:$0xf]
    %v35 = vld [vmem:[%s0 + $0xc] sm:$0xf]
    %v36 = vld [vmem:[%s0 + $0x10] sm:$0xf]
    %v37 = vld [vmem:[%s0 + $0x14] sm:$0xf]
    %v38 = vld [vmem:[%s0 + $0x18] sm:$0xf]
    %v39 = vld [vmem:[%s0 + $0x1c] sm:$0xf]
    %v40 = vld [vmem:[%s0 + $0x20] sm:$0xf]
    %v41 = vld [vmem:[%s0 + $0x24] sm:$0xf]
    %v42 = vld [vmem:[%s0 + $0x28] sm:$0xf]
    %v43 = vld [vmem:[%s0 + $0x2c] sm:$0xf]
    %v44 = vld [vmem:[%s0 + $0x30] sm:$0xf]
    %v45 = vld [vmem:[%s0 + $0x34] sm:$0xf]
    %v46 = vld [vmem:[%s0 + $0x38] sm:$0xf]
    %v47 = vld [vmem:[%s0 + $0x3c] sm:$0xf]
    %v48 = vld [vmem:[%s0 + $0x40] sm:$0xf]
    %v49 = vld [vmem:[%s0 + $0x44] sm:$0xf]
    %v50 = vld [vmem:[%s0 + $0x48] sm:$0xf]
    %v51 = vld [vmem:[%s0 + $0x4c] sm:$0xf]
    %v52 = vld [vmem:[%s0 + $0x50] sm:$0xf]
    %v53 = vld [vmem:[%s0 + $0x54] sm:$0xf]
    %v54 = vld [vmem:[%s0 + $0x58] sm:$0xf]
    %v55 = vld [vmem:[%s0 + $0x5c] sm:$0xf]
    %v56 = vld [vmem:[%s0 + $0x60] sm:$0xf]
    %v57 = vld [vmem:[%s0 + $0x64] sm:$0xf]
    %v58 = vld [vmem:[%s0 + $0x68] sm:$0xf]
    %v59 = vld [vmem:[%s0 + $0x6c] sm:$0xf]
    %v60 = vld [vmem:[%s0 + $0x70] sm:$0xf]
    %v61 = vld [vmem:[%s0 + $0x74] sm:$0xf]
    %v62 = vld [vmem:[%s0 + $0x78] sm:$0xf]
    %v63 = vld [vmem:[%s0 + $0x7c] sm:$0xf]
    %v64 = vld [vmem:[%s0 + $0x80] sm:$0xf]
    %v65 = vld [vmem:[%s0 + $0x84] sm:$0xf]
    %v66 = vld [vmem:[%s0 + $0x88] sm:$0xf]
    %v67 = vld [vmem:[%s0 + $0x8c] sm:$0xf]
    %v68 = vld [vmem:[%s0 + $0x90] sm:$0xf]
    %v69 = vld [vmem:[%s0 + $0x94] sm:$0xf]
    %v70 = vld [vmem:[%s0 + $0x98] sm:$0xf]
    %v71 = vld [vmem:[%s0 + $0x9c] sm:$0xf]
    %v72 = vld [vmem:[%s0 + $0xa0] sm:$0xf]
    %v73 = vld [vmem:[%s0 + $0xa4] sm:$0xf]
    %v74 = vld [vmem:[%s0 + $0xa8] sm:$0xf]
    %v75 = vld [vmem:[%s0 + $0xac] sm:$0xf]
    %v76 = vld [vmem:[%s0 + $0xb0] sm:$0xf]
    %v77 = vld [vmem:[%s0 + $0xb4] sm:$0xf]
    %v78 = vld [vmem:[%s0 + $0xb8] sm:$0xf]
    %v79 = vld [vmem:[%s0 + $0xbc] sm:$0xf]
    %v80 = vunpack.c.l.bf16 %v32
    %v81 = vunpack.c.l.bf16 %v33
    %v82 = vunpack.c.l.bf16 %v34
    %v83 = vunpack.c.l.bf16 %v35
    %v84 = vunpack.c.l.bf16 %v36
    %v85 = vunpack.c.l.bf16 %v37
    %v86 = vunpack.c.l.bf16 %v38
    %v87 = vunpack.c.l.bf16 %v39
    %v88 = vunpack.c.l.bf16 %v40
    %v89 = vunpack.c.l.bf16 %v41
    %v90 = vunpack.c.l.bf16 %v42
    %v91 = vunpack.c.l.bf16 %v43
    %v92 = vunpack.c.l.bf16 %v44
    %v93 = vunpack.c.l.bf16 %v45
    %v94 = vunpack.c.l.bf16 %v46
    %v95 = vunpack.c.l.bf16 %v47
    %v96 = vunpack.c.l.bf16 %v48
    %v97 = vunpack.c.l.bf16 %v49
    %v98 = vunpack.c.l.bf16 %v50
    %v99 = vunpack.c.l.bf16 %v51
    %v100 = vunpack.c.l.bf16 %v52
    %v101 = vunpack.c.l.bf16 %v53
    %v102 = vunpack.c.l.bf16 %v54
    %v103 = vunpack.c.l.bf16 %v55
    %v104 = vunpack.c.l.bf16 %v56
    %v105 = vunpack.c.l.bf16 %v57
    %v106 = vunpack.c.l.bf16 %v58
    %v107 = vunpack.c.l.bf16 %v59
    %v108 = vunpack.c.l.bf16 %v60
    %v109 = vunpack.c.l.bf16 %v61
    %v110 = vunpack.c.l.bf16 %v62
    %v111 = vunpack.c.l.bf16 %v63
    %v112 = vunpack.c.l.bf16 %v64
    %v113 = vunpack.c.l.bf16 %v65
    %v114 = vunpack.c.l.bf16 %v66
    %v115 = vunpack.c.l.bf16 %v67
    %v116 = vunpack.c.l.bf16 %v68
    %v117 = vunpack.c.l.bf16 %v69
    %v118 = vunpack.c.l.bf16 %v70
    %v119 = vunpack.c.l.bf16 %v71
    %v120 = vunpack.c.l.bf16 %v72
    %v121 = vunpack.c.l.bf16 %v73
    %v122 = vunpack.c.l.bf16 %v74
    %v123 = vunpack.c.l.bf16 %v75
    %v124 = vunpack.c.l.bf16 %v76
    %v125 = vunpack.c.l.bf16 %v77
    %v126 = vunpack.c.l.bf16 %v78
    %v127 = vunpack.c.l.bf16 %v79
    %vm128 = vcmask 130048
    %v129 = vsel %vm128, %v80, 0.0
    %v130 = vsel %vm128, %v81, 0.0
    %v131 = vadd.f32 %v129, %v130
    %v132 = vrot.slane %v131, 4
    %v133 = vadd.f32 %v131, %v132
    %v134 = vrot.slane %v133, 2
    %v135 = vadd.f32 %v133, %v134
    %v136 = vrot.slane %v135, 1
    %v137 = vadd.f32 %v135, %v136
    %v138 = vsel %vm128, %v82, 0.0
    %v139 = vsel %vm128, %v83, 0.0
    %v140 = vadd.f32 %v138, %v139
    %v141 = vrot.slane %v140, 4
    %v142 = vadd.f32 %v140, %v141
    %v143 = vrot.slane %v142, 2
    %v144 = vadd.f32 %v142, %v143
    %v145 = vrot.slane %v144, 1
    %v146 = vadd.f32 %v144, %v145
    %v147 = vsel %vm128, %v84, 0.0
    %v148 = vsel %vm128, %v85, 0.0
    %v149 = vadd.f32 %v147, %v148
    %v150 = vrot.slane %v149, 4
    %v151 = vadd.f32 %v149, %v150
    %v152 = vrot.slane %v151, 2
    %v153 = vadd.f32 %v151, %v152
    %v154 = vrot.slane %v153, 1
    %v155 = vadd.f32 %v153, %v154
    %v156 = vsel %vm128, %v86, 0.0
    %v157 = vsel %vm128, %v87, 0.0
    %v158 = vadd.f32 %v156, %v157
    %v159 = vrot.slane %v158, 4
    %v160 = vadd.f32 %v158, %v159
    %v161 = vrot.slane %v160, 2
    %v162 = vadd.f32 %v160, %v161
    %v163 = vrot.slane %v162, 1
    %v164 = vadd.f32 %v162, %v163
    %v165 = vsel %vm128, %v88, 0.0
    %v166 = vsel %vm128, %v89, 0.0
    %v167 = vadd.f32 %v165, %v166
    %v168 = vrot.slane %v167, 4
    %v169 = vadd.f32 %v167, %v168
    %v170 = vrot.slane %v169, 2
    %v171 = vadd.f32 %v169, %v170
    %v172 = vrot.slane %v171, 1
    %v173 = vadd.f32 %v171, %v172
    %v174 = vsel %vm128, %v90, 0.0
    %v175 = vsel %vm128, %v91, 0.0
    %v176 = vadd.f32 %v174, %v175
    %v177 = vrot.slane %v176, 4
    %v178 = vadd.f32 %v176, %v177
    %v179 = vrot.slane %v178, 2
    %v180 = vadd.f32 %v178, %v179
    %v181 = vrot.slane %v180, 1
    %v182 = vadd.f32 %v180, %v181
    %v183 = vsel %vm128, %v92, 0.0
    %v184 = vsel %vm128, %v93, 0.0
    %v185 = vadd.f32 %v183, %v184
    %v186 = vrot.slane %v185, 4
    %v187 = vadd.f32 %v185, %v186
    %v188 = vrot.slane %v187, 2
    %v189 = vadd.f32 %v187, %v188
    %v190 = vrot.slane %v189, 1
    %v191 = vadd.f32 %v189, %v190
    %v192 = vsel %vm128, %v94, 0.0
    %v193 = vsel %vm128, %v95, 0.0
    %v194 = vadd.f32 %v192, %v193
    %v195 = vrot.slane %v194, 4
    %v196 = vadd.f32 %v194, %v195
    %v197 = vrot.slane %v196, 2
    %v198 = vadd.f32 %v196, %v197
    %v199 = vrot.slane %v198, 1
    %v200 = vadd.f32 %v198, %v199
    %v201 = vsel %vm128, %v96, 0.0
    %v202 = vsel %vm128, %v97, 0.0
    %v203 = vadd.f32 %v201, %v202
    %v204 = vrot.slane %v203, 4
    %v205 = vadd.f32 %v203, %v204
    %v206 = vrot.slane %v205, 2
    %v207 = vadd.f32 %v205, %v206
    %v208 = vrot.slane %v207, 1
    %v209 = vadd.f32 %v207, %v208
    %v210 = vsel %vm128, %v98, 0.0
    %v211 = vsel %vm128, %v99, 0.0
    %v212 = vadd.f32 %v210, %v211
    %v213 = vrot.slane %v212, 4
    %v214 = vadd.f32 %v212, %v213
    %v215 = vrot.slane %v214, 2
    %v216 = vadd.f32 %v214, %v215
    %v217 = vrot.slane %v216, 1
    %v218 = vadd.f32 %v216, %v217
    %v219 = vsel %vm128, %v100, 0.0
    %v220 = vsel %vm128, %v101, 0.0
    %v221 = vadd.f32 %v219, %v220
    %v222 = vrot.slane %v221, 4
    %v223 = vadd.f32 %v221, %v222
    %v224 = vrot.slane %v223, 2
    %v225 = vadd.f32 %v223, %v224
    %v226 = vrot.slane %v225, 1
    %v227 = vadd.f32 %v225, %v226
    %v228 = vsel %vm128, %v102, 0.0
    %v229 = vsel %vm128, %v103, 0.0
    %v230 = vadd.f32 %v228, %v229
    %v231 = vrot.slane %v230, 4
    %v232 = vadd.f32 %v230, %v231
    %v233 = vrot.slane %v232, 2
    %v234 = vadd.f32 %v232, %v233
    %v235 = vrot.slane %v234, 1
    %v236 = vadd.f32 %v234, %v235
    %v237 = vsel %vm128, %v104, 0.0
    %v238 = vsel %vm128, %v105, 0.0
    %v239 = vadd.f32 %v237, %v238
    %v240 = vrot.slane %v239, 4
    %v241 = vadd.f32 %v239, %v240
    %v242 = vrot.slane %v241, 2
    %v243 = vadd.f32 %v241, %v242
    %v244 = vrot.slane %v243, 1
    %v245 = vadd.f32 %v243, %v244
    %v246 = vsel %vm128, %v106, 0.0
    %v247 = vsel %vm128, %v107, 0.0
    %v248 = vadd.f32 %v246, %v247
    %v249 = vrot.slane %v248, 4
    %v250 = vadd.f32 %v248, %v249
    %v251 = vrot.slane %v250, 2
    %v252 = vadd.f32 %v250, %v251
    %v253 = vrot.slane %v252, 1
    %v254 = vadd.f32 %v252, %v253
    %v255 = vsel %vm128, %v108, 0.0
    %v256 = vsel %vm128, %v109, 0.0
    %v257 = vadd.f32 %v255, %v256
    %v258 = vrot.slane %v257, 4
    %v259 = vadd.f32 %v257, %v258
    %v260 = vrot.slane %v259, 2
    %v261 = vadd.f32 %v259, %v260
    %v262 = vrot.slane %v261, 1
    %v263 = vadd.f32 %v261, %v262
    %v264 = vsel %vm128, %v110, 0.0
    %v265 = vsel %vm128, %v111, 0.0
    %v266 = vadd.f32 %v264, %v265
    %v267 = vrot.slane %v266, 4
    %v268 = vadd.f32 %v266, %v267
    %v269 = vrot.slane %v268, 2
    %v270 = vadd.f32 %v268, %v269
    %v271 = vrot.slane %v270, 1
    %v272 = vadd.f32 %v270, %v271
    %v273 = vsel %vm128, %v112, 0.0
    %v274 = vsel %vm128, %v113, 0.0
    %v275 = vadd.f32 %v273, %v274
    %v276 = vrot.slane %v275, 4
    %v277 = vadd.f32 %v275, %v276
    %v278 = vrot.slane %v277, 2
    %v279 = vadd.f32 %v277, %v278
    %v280 = vrot.slane %v279, 1
    %v281 = vadd.f32 %v279, %v280
    %v282 = vsel %vm128, %v114, 0.0
    %v283 = vsel %vm128, %v115, 0.0
    %v284 = vadd.f32 %v282, %v283
    %v285 = vrot.slane %v284, 4
    %v286 = vadd.f32 %v284, %v285
    %v287 = vrot.slane %v286, 2
    %v288 = vadd.f32 %v286, %v287
    %v289 = vrot.slane %v288, 1
    %v290 = vadd.f32 %v288, %v289
    %v291 = vsel %vm128, %v116, 0.0
    %v292 = vsel %vm128, %v117, 0.0
    %v293 = vadd.f32 %v291, %v292
    %v294 = vrot.slane %v293, 4
    %v295 = vadd.f32 %v293, %v294
    %v296 = vrot.slane %v295, 2
    %v297 = vadd.f32 %v295, %v296
    %v298 = vrot.slane %v297, 1
    %v299 = vadd.f32 %v297, %v298
    %v300 = vsel %vm128, %v118, 0.0
    %v301 = vsel %vm128, %v119, 0.0
    %v302 = vadd.f32 %v300, %v301
    %v303 = vrot.slane %v302, 4
    %v304 = vadd.f32 %v302, %v303
    %v305 = vrot.slane %v304, 2
    %v306 = vadd.f32 %v304, %v305
    %v307 = vrot.slane %v306, 1
    %v308 = vadd.f32 %v306, %v307
    %v309 = vsel %vm128, %v120, 0.0
    %v310 = vsel %vm128, %v121, 0.0
    %v311 = vadd.f32 %v309, %v310
    %v312 = vrot.slane %v311, 4
    %v313 = vadd.f32 %v311, %v312
    %v314 = vrot.slane %v313, 2
    %v315 = vadd.f32 %v313, %v314
    %v316 = vrot.slane %v315, 1
    %v317 = vadd.f32 %v315, %v316
    %v318 = vsel %vm128, %v122, 0.0
    %v319 = vsel %vm128, %v123, 0.0
    %v320 = vadd.f32 %v318, %v319
    %v321 = vrot.slane %v320, 4
    %v322 = vadd.f32 %v320, %v321
    %v323 = vrot.slane %v322, 2
    %v324 = vadd.f32 %v322, %v323
    %v325 = vrot.slane %v324, 1
    %v326 = vadd.f32 %v324, %v325
    %v327 = vsel %vm128, %v124, 0.0
    %v328 = vsel %vm128, %v125, 0.0
    %v329 = vadd.f32 %v327, %v328
    %v330 = vrot.slane %v329, 4
    %v331 = vadd.f32 %v329, %v330
    %v332 = vrot.slane %v331, 2
    %v333 = vadd.f32 %v331, %v332
    %v334 = vrot.slane %v333, 1
    %v335 = vadd.f32 %v333, %v334
    %v336 = vsel %vm128, %v126, 0.0
    %v337 = vsel %vm128, %v127, 0.0
    %v338 = vadd.f32 %v336, %v337
    %v339 = vrot.slane %v338, 4
    %v340 = vadd.f32 %v338, %v339
    %v341 = vrot.slane %v340, 2
    %v342 = vadd.f32 %v340, %v341
    %v343 = vrot.slane %v342, 1
    %v344 = vadd.f32 %v342, %v343
    %vm369 = vcmask 1041409
    %v370 = vsel %vm369, %v146, %v137
    %vm371 = vcmask 1042434
    %v372 = vsel %vm371, %v155, %v370
    %v373 = vsel %vm369, %v173, %v164
    %v374 = vsel %vm371, %v182, %v373
    %v375 = vsel %vm369, %v200, %v191
    %v376 = vsel %vm371, %v209, %v375
    %v377 = vsel %vm369, %v227, %v218
    %v378 = vsel %vm371, %v236, %v377
    %v379 = vsel %vm369, %v254, %v245
    %v380 = vsel %vm371, %v263, %v379
    %v381 = vsel %vm369, %v281, %v272
    %v382 = vsel %vm371, %v290, %v381
    %v383 = vsel %vm369, %v308, %v299
    %v384 = vsel %vm371, %v317, %v383
    %v385 = vsel %vm369, %v335, %v326
    %v386 = vsel %vm371, %v344, %v385
    %vm395 = vcmask 1042432
    %v396 = vsel %vm395, %v372, 1.0
    %v397 = vsel %vm395, %v374, 1.0
    %v398 = vsel %vm395, %v376, 1.0
    %v399 = vsel %vm395, %v378, 1.0
    %v400 = vsel %vm395, %v380, 1.0
    %v401 = vsel %vm395, %v382, 1.0
    %v402 = vsel %vm395, %v384, 1.0
    %v403 = vsel %vm395, %v386, 1.0
    %v404 = vld [vmem:[%s1] sm:$0xff]
    %v405 = vld [vmem:[%s1 + $0x8] sm:$0xff]
    %v406 = vld [vmem:[%s1 + $0x10] sm:$0xff]
    %v407 = vld [vmem:[%s1 + $0x18] sm:$0xff]
    %v408 = vld [vmem:[%s1 + $0x20] sm:$0xff]
    %v409 = vld [vmem:[%s1 + $0x28] sm:$0xff]
    %v410 = vld [vmem:[%s1 + $0x30] sm:$0xff]
    %v411 = vld [vmem:[%s1 + $0x38] sm:$0xff]
    %v412 = vld [vmem:[%s1 + $0x40] sm:$0xff]
    %v413 = vld [vmem:[%s1 + $0x48] sm:$0xff]
    %v414 = vld [vmem:[%s1 + $0x50] sm:$0xff]
    %v415 = vld [vmem:[%s1 + $0x58] sm:$0xff]
    %v416 = vld [vmem:[%s1 + $0x60] sm:$0xff]
    %v417 = vld [vmem:[%s1 + $0x68] sm:$0xff]
    %v418 = vld [vmem:[%s1 + $0x70] sm:$0xff]
    %v419 = vld [vmem:[%s1 + $0x78] sm:$0xff]
    %v421 = vsel %vm128, %v396, 0
    %423 = vmatprep.subr.mxu0 0.0
    %424 = vmatpush1.msra.mxu0 0.0
    %425 = vmatprep.subr.mxu0 0.0
    %426 = vmatpush1.msra.mxu0 0.0
    %427 = vmatprep.subr.mxu0 0.0
    %428 = vmatpush1.msra.mxu0 0.0
    %429 = vmatprep.subr.mxu0 0.0
    %430 = vmatpush1.msra.mxu0 0.0
    %431 = vmatprep.subr.mxu0 0.0
    %432 = vmatpush1.msra.mxu0 0.0
    %433 = vmatprep.subr.mxu0 0.0
    %434 = vmatpush1.msra.mxu0 0.0
    %435 = vmatprep.subr.mxu0 0.0
    %436 = vmatpush1.msra.mxu0 0.0
    %437 = vmatprep.subr.mxu0 0.0
    %438 = vmatpush1.msra.mxu0 0.0
    %439 = vmatprep.subr.mxu0 0.0
    %440 = vmatpush1.msra.mxu0 0.0
    %441 = vmatprep.subr.mxu0 0.0
    %442 = vmatpush1.msra.mxu0 0.0
    %443 = vmatprep.subr.mxu0 0.0
    %444 = vmatpush1.msra.mxu0 0.0
    %445 = vmatprep.subr.mxu0 0.0
    %446 = vmatpush1.msra.mxu0 0.0
    %447 = vmatprep.subr.mxu0 0.0
    %448 = vmatpush1.msra.mxu0 0.0
    %449 = vmatprep.subr.mxu0 0.0
    %450 = vmatpush1.msra.mxu0 0.0
    %451 = vmatprep.subr.mxu0 0.0
    %452 = vmatpush1.msra.mxu0 %v405
    %453 = vmatprep.subr.mxu0 0.0
    %454 = vmatpush1.msra.mxu0 %v404
    %455 = vmatprep.subr.mxu0 0.0
    %456 = vmatpush2.msra.mxu0 0.0
    %457 = vmatprep.subr.mxu0 0.0
    %458 = vmatpush2.msra.mxu0 0.0
    %459 = vmatprep.subr.mxu0 0.0
    %460 = vmatpush2.msra.mxu0 0.0
    %461 = vmatprep.subr.mxu0 0.0
    %462 = vmatpush2.msra.mxu0 0.0
    %463 = vmatprep.subr.mxu0 0.0
    %464 = vmatpush2.msra.mxu0 0.0
    %465 = vmatprep.subr.mxu0 0.0
    %466 = vmatpush2.msra.mxu0 0.0
    %467 = vmatprep.subr.mxu0 0.0
    %468 = vmatpush2.msra.mxu0 0.0
    %469 = vmatprep.subr.mxu0 0.0
    %470 = vmatpush2.msra.mxu0 0.0
    %471 = vmatprep.subr.mxu0 0.0
    %472 = vmatpush2.msra.mxu0 0.0
    %473 = vmatprep.subr.mxu0 0.0
    %474 = vmatpush2.msra.mxu0 0.0
    %475 = vmatprep.subr.mxu0 0.0
    %476 = vmatpush2.msra.mxu0 0.0
    %477 = vmatprep.subr.mxu0 0.0
    %478 = vmatpush2.msra.mxu0 0.0
    %479 = vmatprep.subr.mxu0 0.0
    %480 = vmatpush2.msra.mxu0 0.0
    %481 = vmatprep.subr.mxu0 0.0
    %482 = vmatpush2.msra.mxu0 0.0
    %483 = vmatprep.subr.mxu0 0.0
    %484 = vmatpush2.msra.mxu0 0.0
    %485 = vmatprep.subr.mxu0 0.0
    %486 = vmatpush2.msra.mxu0 0.0
    %487 = vmatprep.mubr.f32.mxu0 0.0
    %488 = vmatmul.mubr.f32.gmra.mxu0 %v421
    %v489 = vpop.f32.mrf.mxu0
    %v490 = vadd.f32 0.0, %v489
    %v491 = vpop.f32.mrf.mxu0
    %492 = vdwg.mxu0
    %v494 = vsel %vm128, %v397, 0
    %496 = vmatprep.subr.mxu0 0.0
    %497 = vmatpush1.msra.mxu0 0.0
    %498 = vmatprep.subr.mxu0 0.0
    %499 = vmatpush1.msra.mxu0 0.0
    %500 = vmatprep.subr.mxu0 0.0
    %501 = vmatpush1.msra.mxu0 0.0
    %502 = vmatprep.subr.mxu0 0.0
    %503 = vmatpush1.msra.mxu0 0.0
    %504 = vmatprep.subr.mxu0 0.0
    %505 = vmatpush1.msra.mxu0 0.0
    %506 = vmatprep.subr.mxu0 0.0
    %507 = vmatpush1.msra.mxu0 0.0
    %508 = vmatprep.subr.mxu0 0.0
    %509 = vmatpush1.msra.mxu0 0.0
    %510 = vmatprep.subr.mxu0 0.0
    %511 = vmatpush1.msra.mxu0 0.0
    %512 = vmatprep.subr.mxu0 0.0
    %513 = vmatpush1.msra.mxu0 0.0
    %514 = vmatprep.subr.mxu0 0.0
    %515 = vmatpush1.msra.mxu0 0.0
    %516 = vmatprep.subr.mxu0 0.0
    %517 = vmatpush1.msra.mxu0 0.0
    %518 = vmatprep.subr.mxu0 0.0
    %519 = vmatpush1.msra.mxu0 0.0
    %520 = vmatprep.subr.mxu0 0.0
    %521 = vmatpush1.msra.mxu0 0.0
    %522 = vmatprep.subr.mxu0 0.0
    %523 = vmatpush1.msra.mxu0 0.0
    %524 = vmatprep.subr.mxu0 0.0
    %525 = vmatpush1.msra.mxu0 %v407
    %526 = vmatprep.subr.mxu0 0.0
    %527 = vmatpush1.msra.mxu0 %v406
    %528 = vmatprep.subr.mxu0 0.0
    %529 = vmatpush2.msra.mxu0 0.0
    %530 = vmatprep.subr.mxu0 0.0
    %531 = vmatpush2.msra.mxu0 0.0
    %532 = vmatprep.subr.mxu0 0.0
    %533 = vmatpush2.msra.mxu0 0.0
    %534 = vmatprep.subr.mxu0 0.0
    %535 = vmatpush2.msra.mxu0 0.0
    %536 = vmatprep.subr.mxu0 0.0
    %537 = vmatpush2.msra.mxu0 0.0
    %538 = vmatprep.subr.mxu0 0.0
    %539 = vmatpush2.msra.mxu0 0.0
    %540 = vmatprep.subr.mxu0 0.0
    %541 = vmatpush2.msra.mxu0 0.0
    %542 = vmatprep.subr.mxu0 0.0
    %543 = vmatpush2.msra.mxu0 0.0
    %544 = vmatprep.subr.mxu0 0.0
    %545 = vmatpush2.msra.mxu0 0.0
    %546 = vmatprep.subr.mxu0 0.0
    %547 = vmatpush2.msra.mxu0 0.0
    %548 = vmatprep.subr.mxu0 0.0
    %549 = vmatpush2.msra.mxu0 0.0
    %550 = vmatprep.subr.mxu0 0.0
    %551 = vmatpush2.msra.mxu0 0.0
    %552 = vmatprep.subr.mxu0 0.0
    %553 = vmatpush2.msra.mxu0 0.0
    %554 = vmatprep.subr.mxu0 0.0
    %555 = vmatpush2.msra.mxu0 0.0
    %556 = vmatprep.subr.mxu0 0.0
    %557 = vmatpush2.msra.mxu0 0.0
    %558 = vmatprep.subr.mxu0 0.0
    %559 = vmatpush2.msra.mxu0 0.0
    %560 = vmatprep.mubr.f32.mxu0 0.0
    %561 = vmatmul.mubr.f32.gmra.mxu0 %v494
    %v562 = vpop.f32.mrf.mxu0
    %v563 = vadd.f32 0.0, %v562
    %v564 = vpop.f32.mrf.mxu0
    %565 = vdwg.mxu0
    %v567 = vsel %vm128, %v398, 0
    %569 = vmatprep.subr.mxu0 0.0
    %570 = vmatpush1.msra.mxu0 0.0
    %571 = vmatprep.subr.mxu0 0.0
    %572 = vmatpush1.msra.mxu0 0.0
    %573 = vmatprep.subr.mxu0 0.0
    %574 = vmatpush1.msra.mxu0 0.0
    %575 = vmatprep.subr.mxu0 0.0
    %576 = vmatpush1.msra.mxu0 0.0
    %577 = vmatprep.subr.mxu0 0.0
    %578 = vmatpush1.msra.mxu0 0.0
    %579 = vmatprep.subr.mxu0 0.0
    %580 = vmatpush1.msra.mxu0 0.0
    %581 = vmatprep.subr.mxu0 0.0
    %582 = vmatpush1.msra.mxu0 0.0
    %583 = vmatprep.subr.mxu0 0.0
    %584 = vmatpush1.msra.mxu0 0.0
    %585 = vmatprep.subr.mxu0 0.0
    %586 = vmatpush1.msra.mxu0 0.0
    %587 = vmatprep.subr.mxu0 0.0
    %588 = vmatpush1.msra.mxu0 0.0
    %589 = vmatprep.subr.mxu0 0.0
    %590 = vmatpush1.msra.mxu0 0.0
    %591 = vmatprep.subr.mxu0 0.0
    %592 = vmatpush1.msra.mxu0 0.0
    %593 = vmatprep.subr.mxu0 0.0
    %594 = vmatpush1.msra.mxu0 0.0
    %595 = vmatprep.subr.mxu0 0.0
    %596 = vmatpush1.msra.mxu0 0.0
    %597 = vmatprep.subr.mxu0 0.0
    %598 = vmatpush1.msra.mxu0 %v409
    %599 = vmatprep.subr.mxu0 0.0
    %600 = vmatpush1.msra.mxu0 %v408
    %601 = vmatprep.subr.mxu0 0.0
    %602 = vmatpush2.msra.mxu0 0.0
    %603 = vmatprep.subr.mxu0 0.0
    %604 = vmatpush2.msra.mxu0 0.0
    %605 = vmatprep.subr.mxu0 0.0
    %606 = vmatpush2.msra.mxu0 0.0
    %607 = vmatprep.subr.mxu0 0.0
    %608 = vmatpush2.msra.mxu0 0.0
    %609 = vmatprep.subr.mxu0 0.0
    %610 = vmatpush2.msra.mxu0 0.0
    %611 = vmatprep.subr.mxu0 0.0
    %612 = vmatpush2.msra.mxu0 0.0
    %613 = vmatprep.subr.mxu0 0.0
    %614 = vmatpush2.msra.mxu0 0.0
    %615 = vmatprep.subr.mxu0 0.0
    %616 = vmatpush2.msra.mxu0 0.0
    %617 = vmatprep.subr.mxu0 0.0
    %618 = vmatpush2.msra.mxu0 0.0
    %619 = vmatprep.subr.mxu0 0.0
    %620 = vmatpush2.msra.mxu0 0.0
    %621 = vmatprep.subr.mxu0 0.0
    %622 = vmatpush2.msra.mxu0 0.0
    %623 = vmatprep.subr.mxu0 0.0
    %624 = vmatpush2.msra.mxu0 0.0
    %625 = vmatprep.subr.mxu0 0.0
    %626 = vmatpush2.msra.mxu0 0.0
    %627 = vmatprep.subr.mxu0 0.0
    %628 = vmatpush2.msra.mxu0 0.0
    %629 = vmatprep.subr.mxu0 0.0
    %630 = vmatpush2.msra.mxu0 0.0
    %631 = vmatprep.subr.mxu0 0.0
    %632 = vmatpush2.msra.mxu0 0.0
    %633 = vmatprep.mubr.f32.mxu0 0.0
    %634 = vmatmul.mubr.f32.gmra.mxu0 %v567
    %v635 = vpop.f32.mrf.mxu0
    %v636 = vadd.f32 0.0, %v635
    %v637 = vpop.f32.mrf.mxu0
    %638 = vdwg.mxu0
    %v640 = vsel %vm128, %v399, 0
    %642 = vmatprep.subr.mxu0 0.0
    %643 = vmatpush1.msra.mxu0 0.0
    %644 = vmatprep.subr.mxu0 0.0
    %645 = vmatpush1.msra.mxu0 0.0
    %646 = vmatprep.subr.mxu0 0.0
    %647 = vmatpush1.msra.mxu0 0.0
    %648 = vmatprep.subr.mxu0 0.0
    %649 = vmatpush1.msra.mxu0 0.0
    %650 = vmatprep.subr.mxu0 0.0
    %651 = vmatpush1.msra.mxu0 0.0
    %652 = vmatprep.subr.mxu0 0.0
    %653 = vmatpush1.msra.mxu0 0.0
    %654 = vmatprep.subr.mxu0 0.0
    %655 = vmatpush1.msra.mxu0 0.0
    %656 = vmatprep.subr.mxu0 0.0
    %657 = vmatpush1.msra.mxu0 0.0
    %658 = vmatprep.subr.mxu0 0.0
    %659 = vmatpush1.msra.mxu0 0.0
    %660 = vmatprep.subr.mxu0 0.0
    %661 = vmatpush1.msra.mxu0 0.0
    %662 = vmatprep.subr.mxu0 0.0
    %663 = vmatpush1.msra.mxu0 0.0
    %664 = vmatprep.subr.mxu0 0.0
    %665 = vmatpush1.msra.mxu0 0.0
    %666 = vmatprep.subr.mxu0 0.0
    %667 = vmatpush1.msra.mxu0 0.0
    %668 = vmatprep.subr.mxu0 0.0
    %669 = vmatpush1.msra.mxu0 0.0
    %670 = vmatprep.subr.mxu0 0.0
    %671 = vmatpush1.msra.mxu0 %v411
    %672 = vmatprep.subr.mxu0 0.0
    %673 = vmatpush1.msra.mxu0 %v410
    %674 = vmatprep.subr.mxu0 0.0
    %675 = vmatpush2.msra.mxu0 0.0
    %676 = vmatprep.subr.mxu0 0.0
    %677 = vmatpush2.msra.mxu0 0.0
    %678 = vmatprep.subr.mxu0 0.0
    %679 = vmatpush2.msra.mxu0 0.0
    %680 = vmatprep.subr.mxu0 0.0
    %681 = vmatpush2.msra.mxu0 0.0
    %682 = vmatprep.subr.mxu0 0.0
    %683 = vmatpush2.msra.mxu0 0.0
    %684 = vmatprep.subr.mxu0 0.0
    %685 = vmatpush2.msra.mxu0 0.0
    %686 = vmatprep.subr.mxu0 0.0
    %687 = vmatpush2.msra.mxu0 0.0
    %688 = vmatprep.subr.mxu0 0.0
    %689 = vmatpush2.msra.mxu0 0.0
    %690 = vmatprep.subr.mxu0 0.0
    %691 = vmatpush2.msra.mxu0 0.0
    %692 = vmatprep.subr.mxu0 0.0
    %693 = vmatpush2.msra.mxu0 0.0
    %694 = vmatprep.subr.mxu0 0.0
    %695 = vmatpush2.msra.mxu0 0.0
    %696 = vmatprep.subr.mxu0 0.0
    %697 = vmatpush2.msra.mxu0 0.0
    %698 = vmatprep.subr.mxu0 0.0
    %699 = vmatpush2.msra.mxu0 0.0
    %700 = vmatprep.subr.mxu0 0.0
    %701 = vmatpush2.msra.mxu0 0.0
    %702 = vmatprep.subr.mxu0 0.0
    %703 = vmatpush2.msra.mxu0 0.0
    %704 = vmatprep.subr.mxu0 0.0
    %705 = vmatpush2.msra.mxu0 0.0
    %706 = vmatprep.mubr.f32.mxu0 0.0
    %707 = vmatmul.mubr.f32.gmra.mxu0 %v640
    %v708 = vpop.f32.mrf.mxu0
    %v709 = vadd.f32 0.0, %v708
    %v710 = vpop.f32.mrf.mxu0
    %711 = vdwg.mxu0
    %v713 = vsel %vm128, %v400, 0
    %715 = vmatprep.subr.mxu0 0.0
    %716 = vmatpush1.msra.mxu0 0.0
    %717 = vmatprep.subr.mxu0 0.0
    %718 = vmatpush1.msra.mxu0 0.0
    %719 = vmatprep.subr.mxu0 0.0
    %720 = vmatpush1.msra.mxu0 0.0
    %721 = vmatprep.subr.mxu0 0.0
    %722 = vmatpush1.msra.mxu0 0.0
    %723 = vmatprep.subr.mxu0 0.0
    %724 = vmatpush1.msra.mxu0 0.0
    %725 = vmatprep.subr.mxu0 0.0
    %726 = vmatpush1.msra.mxu0 0.0
    %727 = vmatprep.subr.mxu0 0.0
    %728 = vmatpush1.msra.mxu0 0.0
    %729 = vmatprep.subr.mxu0 0.0
    %730 = vmatpush1.msra.mxu0 0.0
    %731 = vmatprep.subr.mxu0 0.0
    %732 = vmatpush1.msra.mxu0 0.0
    %733 = vmatprep.subr.mxu0 0.0
    %734 = vmatpush1.msra.mxu0 0.0
    %735 = vmatprep.subr.mxu0 0.0
    %736 = vmatpush1.msra.mxu0 0.0
    %737 = vmatprep.subr.mxu0 0.0
    %738 = vmatpush1.msra.mxu0 0.0
    %739 = vmatprep.subr.mxu0 0.0
    %740 = vmatpush1.msra.mxu0 0.0
    %741 = vmatprep.subr.mxu0 0.0
    %742 = vmatpush1.msra.mxu0 0.0
    %743 = vmatprep.subr.mxu0 0.0
    %744 = vmatpush1.msra.mxu0 %v413
    %745 = vmatprep.subr.mxu0 0.0
    %746 = vmatpush1.msra.mxu0 %v412
    %747 = vmatprep.subr.mxu0 0.0
    %748 = vmatpush2.msra.mxu0 0.0
    %749 = vmatprep.subr.mxu0 0.0
    %750 = vmatpush2.msra.mxu0 0.0
    %751 = vmatprep.subr.mxu0 0.0
    %752 = vmatpush2.msra.mxu0 0.0
    %753 = vmatprep.subr.mxu0 0.0
    %754 = vmatpush2.msra.mxu0 0.0
    %755 = vmatprep.subr.mxu0 0.0
    %756 = vmatpush2.msra.mxu0 0.0
    %757 = vmatprep.subr.mxu0 0.0
    %758 = vmatpush2.msra.mxu0 0.0
    %759 = vmatprep.subr.mxu0 0.0
    %760 = vmatpush2.msra.mxu0 0.0
    %761 = vmatprep.subr.mxu0 0.0
    %762 = vmatpush2.msra.mxu0 0.0
    %763 = vmatprep.subr.mxu0 0.0
    %764 = vmatpush2.msra.mxu0 0.0
    %765 = vmatprep.subr.mxu0 0.0
    %766 = vmatpush2.msra.mxu0 0.0
    %767 = vmatprep.subr.mxu0 0.0
    %768 = vmatpush2.msra.mxu0 0.0
    %769 = vmatprep.subr.mxu0 0.0
    %770 = vmatpush2.msra.mxu0 0.0
    %771 = vmatprep.subr.mxu0 0.0
    %772 = vmatpush2.msra.mxu0 0.0
    %773 = vmatprep.subr.mxu0 0.0
    %774 = vmatpush2.msra.mxu0 0.0
    %775 = vmatprep.subr.mxu0 0.0
    %776 = vmatpush2.msra.mxu0 0.0
    %777 = vmatprep.subr.mxu0 0.0
    %778 = vmatpush2.msra.mxu0 0.0
    %779 = vmatprep.mubr.f32.mxu0 0.0
    %780 = vmatmul.mubr.f32.gmra.mxu0 %v713
    %v781 = vpop.f32.mrf.mxu0
    %v782 = vadd.f32 0.0, %v781
    %v783 = vpop.f32.mrf.mxu0
    %784 = vdwg.mxu0
    %v786 = vsel %vm128, %v401, 0
    %788 = vmatprep.subr.mxu0 0.0
    %789 = vmatpush1.msra.mxu0 0.0
    %790 = vmatprep.subr.mxu0 0.0
    %791 = vmatpush1.msra.mxu0 0.0
    %792 = vmatprep.subr.mxu0 0.0
    %793 = vmatpush1.msra.mxu0 0.0
    %794 = vmatprep.subr.mxu0 0.0
    %795 = vmatpush1.msra.mxu0 0.0
    %796 = vmatprep.subr.mxu0 0.0
    %797 = vmatpush1.msra.mxu0 0.0
    %798 = vmatprep.subr.mxu0 0.0
    %799 = vmatpush1.msra.mxu0 0.0
    %800 = vmatprep.subr.mxu0 0.0
    %801 = vmatpush1.msra.mxu0 0.0
    %802 = vmatprep.subr.mxu0 0.0
    %803 = vmatpush1.msra.mxu0 0.0
    %804 = vmatprep.subr.mxu0 0.0
    %805 = vmatpush1.msra.mxu0 0.0
    %806 = vmatprep.subr.mxu0 0.0
    %807 = vmatpush1.msra.mxu0 0.0
    %808 = vmatprep.subr.mxu0 0.0
    %809 = vmatpush1.msra.mxu0 0.0
    %810 = vmatprep.subr.mxu0 0.0
    %811 = vmatpush1.msra.mxu0 0.0
    %812 = vmatprep.subr.mxu0 0.0
    %813 = vmatpush1.msra.mxu0 0.0
    %814 = vmatprep.subr.mxu0 0.0
    %815 = vmatpush1.msra.mxu0 0.0
    %816 = vmatprep.subr.mxu0 0.0
    %817 = vmatpush1.msra.mxu0 %v415
    %818 = vmatprep.subr.mxu0 0.0
    %819 = vmatpush1.msra.mxu0 %v414
    %820 = vmatprep.subr.mxu0 0.0
    %821 = vmatpush2.msra.mxu0 0.0
    %822 = vmatprep.subr.mxu0 0.0
    %823 = vmatpush2.msra.mxu0 0.0
    %824 = vmatprep.subr.mxu0 0.0
    %825 = vmatpush2.msra.mxu0 0.0
    %826 = vmatprep.subr.mxu0 0.0
    %827 = vmatpush2.msra.mxu0 0.0
    %828 = vmatprep.subr.mxu0 0.0
    %829 = vmatpush2.msra.mxu0 0.0
    %830 = vmatprep.subr.mxu0 0.0
    %831 = vmatpush2.msra.mxu0 0.0
    %832 = vmatprep.subr.mxu0 0.0
    %833 = vmatpush2.msra.mxu0 0.0
    %834 = vmatprep.subr.mxu0 0.0
    %835 = vmatpush2.msra.mxu0 0.0
    %836 = vmatprep.subr.mxu0 0.0
    %837 = vmatpush2.msra.mxu0 0.0
    %838 = vmatprep.subr.mxu0 0.0
    %839 = vmatpush2.msra.mxu0 0.0
    %840 = vmatprep.subr.mxu0 0.0
    %841 = vmatpush2.msra.mxu0 0.0
    %842 = vmatprep.subr.mxu0 0.0
    %843 = vmatpush2.msra.mxu0 0.0
    %844 = vmatprep.subr.mxu0 0.0
    %845 = vmatpush2.msra.mxu0 0.0
    %846 = vmatprep.subr.mxu0 0.0
    %847 = vmatpush2.msra.mxu0 0.0
    %848 = vmatprep.subr.mxu0 0.0
    %849 = vmatpush2.msra.mxu0 0.0
    %850 = vmatprep.subr.mxu0 0.0
    %851 = vmatpush2.msra.mxu0 0.0
    %852 = vmatprep.mubr.f32.mxu0 0.0
    %853 = vmatmul.mubr.f32.gmra.mxu0 %v786
    %v854 = vpop.f32.mrf.mxu0
    %v855 = vadd.f32 0.0, %v854
    %v856 = vpop.f32.mrf.mxu0
    %857 = vdwg.mxu0
    %v859 = vsel %vm128, %v402, 0
    %861 = vmatprep.subr.mxu0 0.0
    %862 = vmatpush1.msra.mxu0 0.0
    %863 = vmatprep.subr.mxu0 0.0
    %864 = vmatpush1.msra.mxu0 0.0
    %865 = vmatprep.subr.mxu0 0.0
    %866 = vmatpush1.msra.mxu0 0.0
    %867 = vmatprep.subr.mxu0 0.0
    %868 = vmatpush1.msra.mxu0 0.0
    %869 = vmatprep.subr.mxu0 0.0
    %870 = vmatpush1.msra.mxu0 0.0
    %871 = vmatprep.subr.mxu0 0.0
    %872 = vmatpush1.msra.mxu0 0.0
    %873 = vmatprep.subr.mxu0 0.0
    %874 = vmatpush1.msra.mxu0 0.0
    %875 = vmatprep.subr.mxu0 0.0
    %876 = vmatpush1.msra.mxu0 0.0
    %877 = vmatprep.subr.mxu0 0.0
    %878 = vmatpush1.msra.mxu0 0.0
    %879 = vmatprep.subr.mxu0 0.0
    %880 = vmatpush1.msra.mxu0 0.0
    %881 = vmatprep.subr.mxu0 0.0
    %882 = vmatpush1.msra.mxu0 0.0
    %883 = vmatprep.subr.mxu0 0.0
    %884 = vmatpush1.msra.mxu0 0.0
    %885 = vmatprep.subr.mxu0 0.0
    %886 = vmatpush1.msra.mxu0 0.0
    %887 = vmatprep.subr.mxu0 0.0
    %888 = vmatpush1.msra.mxu0 0.0
    %889 = vmatprep.subr.mxu0 0.0
    %890 = vmatpush1.msra.mxu0 %v417
    %891 = vmatprep.subr.mxu0 0.0
    %892 = vmatpush1.msra.mxu0 %v416
    %893 = vmatprep.subr.mxu0 0.0
    %894 = vmatpush2.msra.mxu0 0.0
    %895 = vmatprep.subr.mxu0 0.0
    %896 = vmatpush2.msra.mxu0 0.0
    %897 = vmatprep.subr.mxu0 0.0
    %898 = vmatpush2.msra.mxu0 0.0
    %899 = vmatprep.subr.mxu0 0.0
    %900 = vmatpush2.msra.mxu0 0.0
    %901 = vmatprep.subr.mxu0 0.0
    %902 = vmatpush2.msra.mxu0 0.0
    %903 = vmatprep.subr.mxu0 0.0
    %904 = vmatpush2.msra.mxu0 0.0
    %905 = vmatprep.subr.mxu0 0.0
    %906 = vmatpush2.msra.mxu0 0.0
    %907 = vmatprep.subr.mxu0 0.0
    %908 = vmatpush2.msra.mxu0 0.0
    %909 = vmatprep.subr.mxu0 0.0
    %910 = vmatpush2.msra.mxu0 0.0
    %911 = vmatprep.subr.mxu0 0.0
    %912 = vmatpush2.msra.mxu0 0.0
    %913 = vmatprep.subr.mxu0 0.0
    %914 = vmatpush2.msra.mxu0 0.0
    %915 = vmatprep.subr.mxu0 0.0
    %916 = vmatpush2.msra.mxu0 0.0
    %917 = vmatprep.subr.mxu0 0.0
    %918 = vmatpush2.msra.mxu0 0.0
    %919 = vmatprep.subr.mxu0 0.0
    %920 = vmatpush2.msra.mxu0 0.0
    %921 = vmatprep.subr.mxu0 0.0
    %922 = vmatpush2.msra.mxu0 0.0
    %923 = vmatprep.subr.mxu0 0.0
    %924 = vmatpush2.msra.mxu0 0.0
    %925 = vmatprep.mubr.f32.mxu0 0.0
    %926 = vmatmul.mubr.f32.gmra.mxu0 %v859
    %v927 = vpop.f32.mrf.mxu0
    %v928 = vadd.f32 0.0, %v927
    %v929 = vpop.f32.mrf.mxu0
    %930 = vdwg.mxu0
    %v932 = vsel %vm128, %v403, 0
    %934 = vmatprep.subr.mxu0 0.0
    %935 = vmatpush1.msra.mxu0 0.0
    %936 = vmatprep.subr.mxu0 0.0
    %937 = vmatpush1.msra.mxu0 0.0
    %938 = vmatprep.subr.mxu0 0.0
    %939 = vmatpush1.msra.mxu0 0.0
    %940 = vmatprep.subr.mxu0 0.0
    %941 = vmatpush1.msra.mxu0 0.0
    %942 = vmatprep.subr.mxu0 0.0
    %943 = vmatpush1.msra.mxu0 0.0
    %944 = vmatprep.subr.mxu0 0.0
    %945 = vmatpush1.msra.mxu0 0.0
    %946 = vmatprep.subr.mxu0 0.0
    %947 = vmatpush1.msra.mxu0 0.0
    %948 = vmatprep.subr.mxu0 0.0
    %949 = vmatpush1.msra.mxu0 0.0
    %950 = vmatprep.subr.mxu0 0.0
    %951 = vmatpush1.msra.mxu0 0.0
    %952 = vmatprep.subr.mxu0 0.0
    %953 = vmatpush1.msra.mxu0 0.0
    %954 = vmatprep.subr.mxu0 0.0
    %955 = vmatpush1.msra.mxu0 0.0
    %956 = vmatprep.subr.mxu0 0.0
    %957 = vmatpush1.msra.mxu0 0.0
    %958 = vmatprep.subr.mxu0 0.0
    %959 = vmatpush1.msra.mxu0 0.0
    %960 = vmatprep.subr.mxu0 0.0
    %961 = vmatpush1.msra.mxu0 0.0
    %962 = vmatprep.subr.mxu0 0.0
    %963 = vmatpush1.msra.mxu0 %v419
    %964 = vmatprep.subr.mxu0 0.0
    %965 = vmatpush1.msra.mxu0 %v418
    %966 = vmatprep.subr.mxu0 0.0
    %967 = vmatpush2.msra.mxu0 0.0
    %968 = vmatprep.subr.mxu0 0.0
    %969 = vmatpush2.msra.mxu0 0.0
    %970 = vmatprep.subr.mxu0 0.0
    %971 = vmatpush2.msra.mxu0 0.0
    %972 = vmatprep.subr.mxu0 0.0
    %973 = vmatpush2.msra.mxu0 0.0
    %974 = vmatprep.subr.mxu0 0.0
    %975 = vmatpush2.msra.mxu0 0.0
    %976 = vmatprep.subr.mxu0 0.0
    %977 = vmatpush2.msra.mxu0 0.0
    %978 = vmatprep.subr.mxu0 0.0
    %979 = vmatpush2.msra.mxu0 0.0
    %980 = vmatprep.subr.mxu0 0.0
    %981 = vmatpush2.msra.mxu0 0.0
    %982 = vmatprep.subr.mxu0 0.0
    %983 = vmatpush2.msra.mxu0 0.0
    %984 = vmatprep.subr.mxu0 0.0
    %985 = vmatpush2.msra.mxu0 0.0
    %986 = vmatprep.subr.mxu0 0.0
    %987 = vmatpush2.msra.mxu0 0.0
    %988 = vmatprep.subr.mxu0 0.0
    %989 = vmatpush2.msra.mxu0 0.0
    %990 = vmatprep.subr.mxu0 0.0
    %991 = vmatpush2.msra.mxu0 0.0
    %992 = vmatprep.subr.mxu0 0.0
    %993 = vmatpush2.msra.mxu0 0.0
    %994 = vmatprep.subr.mxu0 0.0
    %995 = vmatpush2.msra.mxu0 0.0
    %996 = vmatprep.subr.mxu0 0.0
    %997 = vmatpush2.msra.mxu0 0.0
    %998 = vmatprep.mubr.f32.mxu0 0.0
    %999 = vmatmul.mubr.f32.gmra.mxu0 %v932
    %v1000 = vpop.f32.mrf.mxu0
    %v1001 = vadd.f32 0.0, %v1000
    %v1002 = vpop.f32.mrf.mxu0
    %1003 = vdwg.mxu0
    %v1004 = vcombine.low %v490, %v636
    %v1006 = vunpack.c.l.s4 1983009808
    %v1007 = vunpack.c.0.s8 %v1006
    %v1008 = vlaneseq
    %v1009 = vshrl.u32 %v1008, 7
    %v1010 = vsub.s32 %v1007, %v1009
    %v1011 = vrot.slane %v1004, %v1010
    %v1012 = vcombine.low %v563, %v709
    %v1014 = vunpack.c.l.s4 1983009808
    %v1015 = vunpack.c.0.s8 %v1014
    %v1016 = vlaneseq
    %v1017 = vshrl.u32 %v1016, 7
    %v1018 = vsub.s32 %v1015, %v1017
    %v1019 = vrot.slane %v1012, %v1018
    %v1020 = vcombine.low %v782, %v928
    %v1022 = vunpack.c.l.s4 1983009808
    %v1023 = vunpack.c.0.s8 %v1022
    %v1024 = vlaneseq
    %v1025 = vshrl.u32 %v1024, 7
    %v1026 = vsub.s32 %v1023, %v1025
    %v1027 = vrot.slane %v1020, %v1026
    %v1028 = vcombine.low %v855, %v1001
    %v1030 = vunpack.c.l.s4 1983009808
    %v1031 = vunpack.c.0.s8 %v1030
    %v1032 = vlaneseq
    %v1033 = vshrl.u32 %v1032, 7
    %v1034 = vsub.s32 %v1031, %v1033
    %v1035 = vrot.slane %v1028, %v1034
    %v1036 = vcombine.low %v1011, %v1019
    %v1037 = vcombine.high %v1011, %v1019
    %v1039 = vunpack.c.l.s4 1934713408
    %v1040 = vunpack.c.0.s8 %v1039
    %v1041 = vlaneseq
    %v1042 = vshrl.u32 %v1041, 7
    %v1043 = vsub.s32 %v1040, %v1042
    %v1044 = vrot.slane %v1036, %v1043
    %v1046 = vunpack.c.l.s4 1934713408
    %v1047 = vunpack.c.0.s8 %v1046
    %v1048 = vlaneseq
    %v1049 = vshrl.u32 %v1048, 7
    %v1050 = vsub.s32 %v1047, %v1049
    %v1051 = vrot.slane %v1037, %v1050
    %v1052 = vcombine.low %v1027, %v1035
    %v1053 = vcombine.high %v1027, %v1035
    %v1055 = vunpack.c.l.s4 1934713408
    %v1056 = vunpack.c.0.s8 %v1055
    %v1057 = vlaneseq
    %v1058 = vshrl.u32 %v1057, 7
    %v1059 = vsub.s32 %v1056, %v1058
    %v1060 = vrot.slane %v1052, %v1059
    %v1062 = vunpack.c.l.s4 1934713408
    %v1063 = vunpack.c.0.s8 %v1062
    %v1064 = vlaneseq
    %v1065 = vshrl.u32 %v1064, 7
    %v1066 = vsub.s32 %v1063, %v1065
    %v1067 = vrot.slane %v1053, %v1066
    %v1068 = vcombine.low %v1044, %v1060
    %v1069 = vcombine.high %v1044, %v1060
    %v1070 = vcombine.low %v1051, %v1067
    %v1071 = vcombine.high %v1051, %v1067
    %1073 = vrot.lane.b32.xlu0 %v1069, 8
    %v1074 = vpop.permute.xlu0 %1073
    %1077 = vrot.lane.b32.xlu0 %v1070, 16
    %v1078 = vpop.permute.xlu0 %1077
    %1081 = vrot.lane.b32.xlu0 %v1071, 24
    %v1082 = vpop.permute.xlu0 %1081
    %vm1084 = vcmask 64512
    %v1085 = vsel %vm1084, %v1068, %v1074
    %v1086 = vsel %vm128, %v1085, %v1078
    %vm1087 = vcmask 195584
    %v1088 = vsel %vm1087, %v1086, %v1082
    %v1089 = vld [vmem:[#allocation2] sm:$0xff]
    %v1090 = vld [vmem:[#allocation2 + $0x8] sm:$0xff]
    %v1091 = vld [vmem:[#allocation2 + $0x10] sm:$0xff]
    %v1092 = vld [vmem:[#allocation2 + $0x18] sm:$0xff]
    %v1093 = vld [vmem:[%s3] sm:$0x1]
    %v1095 = vlaneseq
    %v1096 = vshrl.u32 %v1095, 7
    %v1097 = vsub.s32 0, %v1096
    %v1098 = vrot.slane %v1093, %v1097
    %vm1100 = vcmask 261120
    %v1102 = vsel %vm1100, %v1088, 0
    %1104 = vmatprep.subr.mxu0 0.0
    %1105 = vmatpush1.msra.mxu0 0.0
    %1106 = vmatprep.subr.mxu0 0.0
    %1107 = vmatpush1.msra.mxu0 0.0
    %1108 = vmatprep.subr.mxu0 0.0
    %1109 = vmatpush1.msra.mxu0 0.0
    %1110 = vmatprep.subr.mxu0 0.0
    %1111 = vmatpush1.msra.mxu0 0.0
    %1112 = vmatprep.subr.mxu0 0.0
    %1113 = vmatpush1.msra.mxu0 0.0
    %1114 = vmatprep.subr.mxu0 0.0
    %1115 = vmatpush1.msra.mxu0 0.0
    %1116 = vmatprep.subr.mxu0 0.0
    %1117 = vmatpush1.msra.mxu0 0.0
    %1118 = vmatprep.subr.mxu0 0.0
    %1119 = vmatpush1.msra.mxu0 0.0
    %1120 = vmatprep.subr.mxu0 0.0
    %1121 = vmatpush1.msra.mxu0 0.0
    %1122 = vmatprep.subr.mxu0 0.0
    %1123 = vmatpush1.msra.mxu0 0.0
    %1124 = vmatprep.subr.mxu0 0.0
    %1125 = vmatpush1.msra.mxu0 0.0
    %1126 = vmatprep.subr.mxu0 0.0
    %1127 = vmatpush1.msra.mxu0 0.0
    %1128 = vmatprep.subr.mxu0 0.0
    %1129 = vmatpush1.msra.mxu0 %v1092
    %1130 = vmatprep.subr.mxu0 0.0
    %1131 = vmatpush1.msra.mxu0 %v1091
    %1132 = vmatprep.subr.mxu0 0.0
    %1133 = vmatpush1.msra.mxu0 %v1090
    %1134 = vmatprep.subr.mxu0 0.0
    %1135 = vmatpush1.msra.mxu0 %v1089
    %1136 = vmatprep.subr.mxu0 0.0
    %1137 = vmatpush2.msra.mxu0 0.0
    %1138 = vmatprep.subr.mxu0 0.0
    %1139 = vmatpush2.msra.mxu0 0.0
    %1140 = vmatprep.subr.mxu0 0.0
    %1141 = vmatpush2.msra.mxu0 0.0
    %1142 = vmatprep.subr.mxu0 0.0
    %1143 = vmatpush2.msra.mxu0 0.0
    %1144 = vmatprep.subr.mxu0 0.0
    %1145 = vmatpush2.msra.mxu0 0.0
    %1146 = vmatprep.subr.mxu0 0.0
    %1147 = vmatpush2.msra.mxu0 0.0
    %1148 = vmatprep.subr.mxu0 0.0
    %1149 = vmatpush2.msra.mxu0 0.0
    %1150 = vmatprep.subr.mxu0 0.0
    %1151 = vmatpush2.msra.mxu0 0.0
    %1152 = vmatprep.subr.mxu0 0.0
    %1153 = vmatpush2.msra.mxu0 0.0
    %1154 = vmatprep.subr.mxu0 0.0
    %1155 = vmatpush2.msra.mxu0 0.0
    %1156 = vmatprep.subr.mxu0 0.0
    %1157 = vmatpush2.msra.mxu0 0.0
    %1158 = vmatprep.subr.mxu0 0.0
    %1159 = vmatpush2.msra.mxu0 0.0
    %1160 = vmatprep.subr.mxu0 0.0
    %1161 = vmatpush2.msra.mxu0 0.0
    %1162 = vmatprep.subr.mxu0 0.0
    %1163 = vmatpush2.msra.mxu0 0.0
    %1164 = vmatprep.subr.mxu0 0.0
    %1165 = vmatpush2.msra.mxu0 0.0
    %1166 = vmatprep.subr.mxu0 0.0
    %1167 = vmatpush2.msra.mxu0 0.0
    %1168 = vmatprep.mubr.f32.mxu0 0.0
    %1169 = vmatmul.mubr.f32.gmra.mxu0 %v1102
    %v1170 = vpop.f32.mrf.mxu0
    %v1171 = vadd.f32 %v1098, %v1170
    %v1172 = vpop.f32.mrf.mxu0
    %1173 = vdwg.mxu0
    %1174 = vst [vmem:[#allocation5] sm:$0xff] %v1171
    // Predicated region
    $region22: #{tpu_custom_call.1} parent=1 // pred_check
      _
    $region23: #{tpu_custom_call.1} parent=1 // pred_check_branch
      %1176 = sbr.rel (0) target = $region25
    $region24: #{tpu_custom_call.1} parent=1 // pred_region
      %s1178 = ssub.s32 128, 128
      %1179 = vsyncadd [#allocation4], %s1178
      %s1181 = sshll.u32 [#allocation5], 4
      %s1182 = int_to_ptr.vmem [resolvable:$true] %s1181
      %1184 = dma.vmem_to_hbm [thread:$0]  %s1182, 128, %s4, [#allocation4]
    $region25: #{tpu_custom_call.1} parent=1 // pred_fallthru
      _
    // Predicated region
    $region26: #{tpu_custom_call.1} parent=1 // pred_check
      _
    $region27: #{tpu_custom_call.1} parent=1 // pred_check_branch
      %1186 = sbr.rel (0) target = $region29
    $region28: #{tpu_custom_call.1} parent=1 // pred_region
      %1187 = dma.done [#allocation4], 128
    $region29: #{tpu_custom_call.1} parent=1 // pred_fallthru
      _
    %1188 = vsyncpa [#allocation3], 1
    %1189 = vsyncpa [#allocation4], 1

</llo_original>
